<compile_context>
chip_gen: v5e
topology: v5e:2x2
jax: 0.10.0
libtpu: 0.0.40
codegen_flags: <defaults>
</compile_context>

<pallas_src>
import math
import functools

import numpy as np
import jax
import jax.numpy as jnp
from jax.experimental import pallas as pl
from jax.experimental.pallas import tpu as pltpu


def make_gaussian_taps(kernel_size, sigma, dim=2):
    """Gaussian kernel taps, identical math to the PyTorch __init__ (float32)."""
    if isinstance(kernel_size, (int, float)):
        kernel_size = [int(kernel_size)] * dim
    if isinstance(sigma, (int, float)):
        sigma = [float(sigma)] * dim
    grids = np.meshgrid(
        *[np.arange(s, dtype=np.float32) for s in kernel_size], indexing="ij"
    )  # torch.meshgrid default is 'ij'
    kernel = np.ones((), dtype=np.float32)
    for size, std, mgrid in zip(kernel_size, sigma, grids):
        mean = (size - 1) / 2.0
        kernel = kernel * (
            np.float32(1.0 / (std * math.sqrt(2.0 * math.pi)))
            * np.exp(-(((mgrid - mean) / np.float32(std)) ** 2) / 2.0)
        ).astype(np.float32)
    kernel = kernel / kernel.sum()
    return kernel.astype(np.float32)


def _smooth_kernel(x_ref, o_ref, *, taps, w, kh, kw, out_len):
    """Depthwise valid 2-D conv, lane-dense flat layout, fully unrolled taps.

    x_ref: (N*C, H*W + kw-1) VMEM ref (flat rows, tail-padded for in-bounds reads)
    o_ref: (N*C, Ho*W) VMEM ref; last kw-1 lanes of each output row are
           wrap-garbage and are sliced off in the wrapper.
    taps : tuple-of-tuples of Python floats (compile-time constants).

    Each tap is a shifted full-width window load straight from the ref (load
    unit does the addressing; unaligned lane offsets land on the XLU rotate
    slot), multiply-accumulated on the VPU.
    """
    # Seed the accumulator with the first tap instead of zeros + add.
    acc = taps[0][0] * x_ref[:, pl.ds(0, out_len)].astype(jnp.float32)
    for i in range(kh):
        for j in range(kw):
            if i == 0 and j == 0:
                continue
            off = i * w + j  # flat offset of tap (i, j) in row-major (H, W)
            acc = acc + taps[i][j] * x_ref[:, pl.ds(off, out_len)].astype(jnp.float32)
    o_ref[...] = acc.astype(o_ref.dtype)


def gaussian_smoothing(x, kernel_size=3, sigma=1.0):
    """x: (N, C, H, W) -> (N, C, H-kh+1, W-kw+1), depthwise Gaussian smoothing."""
    n, c, h, w = x.shape
    taps_np = make_gaussian_taps(kernel_size, sigma, dim=2)
    kh, kw = taps_np.shape
    ho, wo = h - kh + 1, w - kw + 1
    # Bake taps as compile-time Python floats (identical for every channel).
    taps = tuple(tuple(float(v) for v in row) for row in taps_np)

    nc = n * c
    out_len = ho * w          # full W per output row (last kw-1 cols = garbage)
    pad = kw - 1              # tail pad so every shifted window stays in-bounds

    # Contiguous, free reshape to a lane-dense (N*C, H*W) view; tiny tail pad.
    x_flat = x.reshape(nc, h * w)
    if pad:
        x_flat = jnp.pad(x_flat, ((0, 0), (0, pad)))
    flat_w = h * w + pad

    kernel = functools.partial(
        _smooth_kernel, taps=taps, w=w, kh=kh, kw=kw, out_len=out_len
    )

    out_flat = pl.pallas_call(
        kernel,
        out_shape=jax.ShapeDtypeStruct((nc, out_len), x.dtype),
        # Single grid step: whole problem fits trivially in VMEM and per-step
        # overhead (~0.35 us) dominates any split at this size.
        grid=(1,),
        in_specs=[pl.BlockSpec((nc, flat_w), lambda i: (0, 0))],
        out_specs=pl.BlockSpec((nc, out_len), lambda i: (0, 0)),
        compiler_params=pltpu.CompilerParams(
            dimension_semantics=("arbitrary",),
        ),
    )(x_flat)

    # Drop the wrap-garbage columns and restore (N, C, Ho, Wo).
    return out_flat.reshape(n, c, ho, w)[:, :, :, :wo]


if __name__ == "__main__":
    # Module config: channels=4, kernel_size=3, sigma=1.0, dim=2
    channels, kernel_size, sigma = 4, 3, 1.0
    N, C, H, W = 2, channels, 16, 16

    key = jax.random.PRNGKey(0)
    x = jax.random.normal(key, (N, C, H, W), dtype=jnp.float32)

    out = gaussian_smoothing(x, kernel_size=kernel_size, sigma=sigma)
    out = jax.block_until_ready(out)

    # Reference: XLA depthwise conv (same semantics as F.conv2d(groups=C)).
    taps_np = make_gaussian_taps(kernel_size, sigma, dim=2)
    weight = jnp.broadcast_to(
        jnp.asarray(taps_np)[None, None, :, :], (C, 1, kernel_size, kernel_size)
    )
    ref = jax.lax.conv_general_dilated(
        x,
        weight,  # (C, 1, kh, kw) == OIHW with I=1 per group
        window_strides=(1, 1),
        padding="VALID",
        dimension_numbers=("NCHW", "OIHW", "NCHW"),
        feature_group_count=C,
    )
    assert out.shape == (N, C, H - kernel_size + 1, W - kernel_size + 1)
    assert jnp.allclose(out, ref, atol=1e-5, rtol=1e-5)

    print("KERNEL_OK")
</pallas_src>

<mosaic_0001>
module attributes {stable_mosaic.version = 11 : i64} {
  func.func @_smooth_kernel(%arg0: i32, %arg1: memref<8x258xf32, #tpu.memory_space<vmem>>, %arg2: memref<8x224xf32, #tpu.memory_space<vmem>>) attributes {dimension_semantics = [#tpu.dimension_semantics<arbitrary>], iteration_bounds = array<i64: 1>, scalar_prefetch = 0 : i64, scratch_operands = 0 : i64, tpu.core_type = #tpu.core_type<tc>, window_params = [{pipeline_mode = #tpu.pipeline_mode<synchronous>, transform_indices = @transform_0, window_bounds = array<i64: 8, 258>}, {pipeline_mode = #tpu.pipeline_mode<synchronous>, transform_indices = @transform_1, window_bounds = array<i64: 8, 224>}]} {
    %c0 = arith.constant 0 : index
    %c0_0 = arith.constant 0 : index
    %0 = vector.load %arg1[%c0, %c0_0] : memref<8x258xf32, #tpu.memory_space<vmem>>, vector<8x224xf32>
    %cst = arith.constant 0.0751136094 : f32
    %1 = vector.broadcast %cst : f32 to vector<8x224xf32>
    %2 = arith.mulf %1, %0 : vector<8x224xf32>
    %c0_1 = arith.constant 0 : index
    %c1 = arith.constant 1 : index
    %3 = vector.load %arg1[%c0_1, %c1] : memref<8x258xf32, #tpu.memory_space<vmem>>, vector<8x224xf32>
    %cst_2 = arith.constant 0.123841405 : f32
    %4 = vector.broadcast %cst_2 : f32 to vector<8x224xf32>
    %5 = arith.mulf %4, %3 : vector<8x224xf32>
    %6 = arith.addf %2, %5 : vector<8x224xf32>
    %c0_3 = arith.constant 0 : index
    %c2 = arith.constant 2 : index
    %7 = vector.load %arg1[%c0_3, %c2] : memref<8x258xf32, #tpu.memory_space<vmem>>, vector<8x224xf32>
    %cst_4 = arith.constant 0.0751136094 : f32
    %8 = vector.broadcast %cst_4 : f32 to vector<8x224xf32>
    %9 = arith.mulf %8, %7 : vector<8x224xf32>
    %10 = arith.addf %6, %9 : vector<8x224xf32>
    %c0_5 = arith.constant 0 : index
    %c16 = arith.constant 16 : index
    %11 = vector.load %arg1[%c0_5, %c16] : memref<8x258xf32, #tpu.memory_space<vmem>>, vector<8x224xf32>
    %cst_6 = arith.constant 0.123841405 : f32
    %12 = vector.broadcast %cst_6 : f32 to vector<8x224xf32>
    %13 = arith.mulf %12, %11 : vector<8x224xf32>
    %14 = arith.addf %10, %13 : vector<8x224xf32>
    %c0_7 = arith.constant 0 : index
    %c17 = arith.constant 17 : index
    %15 = vector.load %arg1[%c0_7, %c17] : memref<8x258xf32, #tpu.memory_space<vmem>>, vector<8x224xf32>
    %cst_8 = arith.constant 0.204179958 : f32
    %16 = vector.broadcast %cst_8 : f32 to vector<8x224xf32>
    %17 = arith.mulf %16, %15 : vector<8x224xf32>
    %18 = arith.addf %14, %17 : vector<8x224xf32>
    %c0_9 = arith.constant 0 : index
    %c18 = arith.constant 18 : index
    %19 = vector.load %arg1[%c0_9, %c18] : memref<8x258xf32, #tpu.memory_space<vmem>>, vector<8x224xf32>
    %cst_10 = arith.constant 0.123841405 : f32
    %20 = vector.broadcast %cst_10 : f32 to vector<8x224xf32>
    %21 = arith.mulf %20, %19 : vector<8x224xf32>
    %22 = arith.addf %18, %21 : vector<8x224xf32>
    %c0_11 = arith.constant 0 : index
    %c32 = arith.constant 32 : index
    %23 = vector.load %arg1[%c0_11, %c32] : memref<8x258xf32, #tpu.memory_space<vmem>>, vector<8x224xf32>
    %cst_12 = arith.constant 0.0751136094 : f32
    %24 = vector.broadcast %cst_12 : f32 to vector<8x224xf32>
    %25 = arith.mulf %24, %23 : vector<8x224xf32>
    %26 = arith.addf %22, %25 : vector<8x224xf32>
    %c0_13 = arith.constant 0 : index
    %c33 = arith.constant 33 : index
    %27 = vector.load %arg1[%c0_13, %c33] : memref<8x258xf32, #tpu.memory_space<vmem>>, vector<8x224xf32>
    %cst_14 = arith.constant 0.123841405 : f32
    %28 = vector.broadcast %cst_14 : f32 to vector<8x224xf32>
    %29 = arith.mulf %28, %27 : vector<8x224xf32>
    %30 = arith.addf %26, %29 : vector<8x224xf32>
    %c0_15 = arith.constant 0 : index
    %c34 = arith.constant 34 : index
    %31 = vector.load %arg1[%c0_15, %c34] : memref<8x258xf32, #tpu.memory_space<vmem>>, vector<8x224xf32>
    %cst_16 = arith.constant 0.0751136094 : f32
    %32 = vector.broadcast %cst_16 : f32 to vector<8x224xf32>
    %33 = arith.mulf %32, %31 : vector<8x224xf32>
    %34 = arith.addf %30, %33 : vector<8x224xf32>
    %c0_17 = arith.constant 0 : index
    %c0_18 = arith.constant 0 : index
    %35 = vector.load %arg2[%c0_17, %c0_18] : memref<8x224xf32, #tpu.memory_space<vmem>>, vector<8x224xf32>
    tpu.vector_store %arg2[%c0_17, %c0_18], %34 {strides = array<i32>} : memref<8x224xf32, #tpu.memory_space<vmem>>, vector<8x224xf32>,
    return
  }
  func.func @transform_0(%arg0: i32) -> (i32, i32) {
    %c0_i32 = arith.constant 0 : i32
    %c0_i32_0 = arith.constant 0 : i32
    %c0_i32_1 = arith.constant 0 : i32
    return %c0_i32, %c0_i32_0 : i32, i32
  }
  func.func @transform_1(%arg0: i32) -> (i32, i32) {
    %c0_i32 = arith.constant 0 : i32
    %c0_i32_0 = arith.constant 0 : i32
    %c0_i32_1 = arith.constant 0 : i32
    return %c0_i32, %c0_i32_0 : i32, i32
  }
}

</mosaic_0001>

<llo_original>
// kernel: tpu_custom_call.1
$region0: #{tpu_custom_call.1}
  #allocation0 [shape = 'u32[]', space=smem, size = 0x4, offset = 0x4, fixed_abs, tag = 'smem constant byte address 0x4 - core index']
  #allocation1 [shape = 'u32[72,128]{1,0:T(1,128)}', space=vmem, size = 0x9000, scoped, tag = 'internal scratch']
  %s0 = inlined_call_operand.hbm [shape: f32[8,258], index: 0, kind: input, shape index: {}]
  %s1 = inlined_call_operand.hbm [shape: f32[8,224], index: 1, kind: output, shape index: {}]
  %s2 = sld [smem:[#allocation0]]
  $region18: #{tpu_custom_call.1} parent=0
    _
  %s4 = ssub.s32 1, %s2
  %s5 = scalar_select 0, %s4, %s2
  $region1: #{tpu_custom_call.1} parent=0
    #allocation2 [shape = 'u8[12288]{0}', space=vmem, size = 0x3000, scoped, tag = 'input window, operand 0, single buffered']
    #allocation3 [shape = 's32[1]{0}', space=sflag, size = 0x4, scoped, tag = 'scoped memory for tpu_custom_call.1']
    #allocation4 [shape = 's32[1]{0}', space=sflag, size = 0x4, scoped, tag = 'scoped memory for tpu_custom_call.1']
    #allocation5 [shape = 'u8[8192]{0}', space=vmem, size = 0x2000, scoped, tag = 'output window, operand 0, single buffered']
    %6 = vsyncpa [#allocation3], 0
    %7 = vsyncpa [#allocation4], 0
    // Predicated region
    $region2: #{tpu_custom_call.1} parent=1 // pred_check
      _
    $region3: #{tpu_custom_call.1} parent=1 // pred_check_branch
      %9 = sbr.rel (0) target = $region5
    $region4: #{tpu_custom_call.1} parent=1 // pred_region
      %11 = vsyncadd [#allocation3], 0
      %s13 = sshll.u32 %s0, 4
      %s14 = int_to_ptr.hbm [resolvable:$true] %s13
      %s15 = sshll.u32 [#allocation2], 4
      %s16 = int_to_ptr.vmem [resolvable:$true] %s15
      %18 = dma.hbm_to_vmem [thread:$0]  %s14, 384, %s16, [#allocation3]
    $region5: #{tpu_custom_call.1} parent=1 // pred_fallthru
      _
    // Predicated region
    $region6: #{tpu_custom_call.1} parent=1 // pred_check
      _
    $region7: #{tpu_custom_call.1} parent=1 // pred_check_branch
      %20 = sbr.rel (0) target = $region9
    $region8: #{tpu_custom_call.1} parent=1 // pred_region
      %22 = dma.done [#allocation3], 384
    $region9: #{tpu_custom_call.1} parent=1 // pred_fallthru
      _
    %v23 = vld [vmem:[#allocation2] sm:$0xff]
    %v24 = vld [vmem:[#allocation2 + $0x8] sm:$0xff]
    %v25 = vmul.f32 %v23, 0.07511361
    %v26 = vmul.f32 %v24, 0.07511361
    %v27 = vmul.f32 %v23, 0.123841405
    %v28 = vmul.f32 %v24, 0.123841405
    %31 = vrot.lane.b32.xlu0 %v27, 127
    %v32 = vpop.permute.xlu0 %31
    %33 = vrot.lane.b32.xlu0 %v28, 127
    %v34 = vpop.permute.xlu0 %33
    %vm35 = vcmask 1039360
    %v36 = vsel %vm35, %v32, %v34
    %v39 = vadd.f32 %v25, %v36
    %v40 = vadd.f32 %v26, %v34
    %43 = vrot.lane.b32.xlu0 %v25, 126
    %v44 = vpop.permute.xlu0 %43
    %45 = vrot.lane.b32.xlu0 %v26, 126
    %v46 = vpop.permute.xlu0 %45
    %vm47 = vcmask 1031168
    %v48 = vsel %vm47, %v44, %v46
    %v51 = vadd.f32 %v39, %v48
    %v52 = vadd.f32 %v40, %v46
    %53 = vrot.lane.b32.xlu0 %v27, 112
    %v54 = vpop.permute.xlu0 %53
    %55 = vrot.lane.b32.xlu0 %v28, 112
    %v56 = vpop.permute.xlu0 %55
    %vm57 = vcmask 916480
    %v58 = vsel %vm57, %v54, %v56
    %v61 = vadd.f32 %v51, %v58
    %v62 = vadd.f32 %v52, %v56
    %v63 = vmul.f32 %v23, 0.20417996
    %v64 = vmul.f32 %v24, 0.20417996
    %67 = vrot.lane.b32.xlu0 %v63, 111
    %v68 = vpop.permute.xlu0 %67
    %69 = vrot.lane.b32.xlu0 %v64, 111
    %v70 = vpop.permute.xlu0 %69
    %vm71 = vcmask 908288
    %v72 = vsel %vm71, %v68, %v70
    %v75 = vadd.f32 %v61, %v72
    %v76 = vadd.f32 %v62, %v70
    %77 = vrot.lane.b32.xlu0 %v27, 110
    %v78 = vpop.permute.xlu0 %77
    %79 = vrot.lane.b32.xlu0 %v28, 110
    %v80 = vpop.permute.xlu0 %79
    %vm81 = vcmask 900096
    %v82 = vsel %vm81, %v78, %v80
    %v85 = vadd.f32 %v75, %v82
    %v86 = vadd.f32 %v76, %v80
    %87 = vrot.lane.b32.xlu0 %v25, 96
    %v88 = vpop.permute.xlu0 %87
    %89 = vrot.lane.b32.xlu0 %v26, 96
    %v90 = vpop.permute.xlu0 %89
    %vm91 = vcmask 785408
    %v92 = vsel %vm91, %v88, %v90
    %v95 = vadd.f32 %v85, %v92
    %v96 = vadd.f32 %v86, %v90
    %v97 = vld [vmem:[#allocation2 + $0x10] sm:$0xff]
    %v98 = vmul.f32 %v97, 0.123841405
    %100 = vrot.lane.b32.xlu0 %v27, 95
    %v101 = vpop.permute.xlu0 %100
    %102 = vrot.lane.b32.xlu0 %v28, 95
    %v103 = vpop.permute.xlu0 %102
    %104 = vrot.lane.b32.xlu0 %v98, 95
    %v105 = vpop.permute.xlu0 %104
    %vm106 = vcmask 777216
    %v107 = vsel %vm106, %v101, %v103
    %v108 = vsel %vm106, %v103, %v105
    %v111 = vadd.f32 %v95, %v107
    %v112 = vadd.f32 %v96, %v108
    %v113 = vmul.f32 %v97, 0.07511361
    %115 = vrot.lane.b32.xlu0 %v25, 94
    %v116 = vpop.permute.xlu0 %115
    %117 = vrot.lane.b32.xlu0 %v26, 94
    %v118 = vpop.permute.xlu0 %117
    %119 = vrot.lane.b32.xlu0 %v113, 94
    %v120 = vpop.permute.xlu0 %119
    %vm121 = vcmask 769024
    %v122 = vsel %vm121, %v116, %v118
    %v123 = vsel %vm121, %v118, %v120
    %v126 = vadd.f32 %v111, %v122
    %v127 = vadd.f32 %v112, %v123
    %128 = vst [vmem:[#allocation5] sm:$0xff] %v126
    %129 = vst.msk [vmem:[#allocation5 + $0x8] sm:$0xff] %vm91, %v127
    // Predicated region
    $region10: #{tpu_custom_call.1} parent=1 // pred_check
      _
    $region11: #{tpu_custom_call.1} parent=1 // pred_check_branch
      %131 = sbr.rel (0) target = $region13
    $region12: #{tpu_custom_call.1} parent=1 // pred_region
      %133 = vsyncadd [#allocation4], 0
      %s135 = sshll.u32 [#allocation5], 4
      %s136 = int_to_ptr.vmem [resolvable:$true] %s135
      %s137 = sshll.u32 %s1, 4
      %s138 = int_to_ptr.hbm [resolvable:$true] %s137
      %140 = dma.vmem_to_hbm [thread:$0]  %s136, 256, %s138, [#allocation4]
    $region13: #{tpu_custom_call.1} parent=1 // pred_fallthru
      _
    // Predicated region
    $region14: #{tpu_custom_call.1} parent=1 // pred_check
      _
    $region15: #{tpu_custom_call.1} parent=1 // pred_check_branch
      %142 = sbr.rel (0) target = $region17
    $region16: #{tpu_custom_call.1} parent=1 // pred_region
      %144 = dma.done [#allocation4], 256
    $region17: #{tpu_custom_call.1} parent=1 // pred_fallthru
      _
    %145 = vsyncpa [#allocation3], 1
    %146 = vsyncpa [#allocation4], 1

</llo_original>
